<compile_context>
chip_gen: v5e
topology: v5e:2x2
jax: 0.10.0
libtpu: 0.0.40
codegen_flags: <defaults>
</compile_context>

<pallas_src>
import jax
import jax.numpy as jnp
from jax.experimental import pallas as pl
from jax.experimental.pallas import tpu as pltpu


def _st_logits_kernel(x_ref, o_ref):
    x = x_ref[...]                                  # (row_tile, C)
    c = x.shape[-1]

    # max over the class (lane) axis
    m = jnp.max(x, axis=-1, keepdims=True)

    # first-occurrence argmax (matches torch.max tie-breaking)
    lane_idx = jax.lax.broadcasted_iota(jnp.int32, x.shape, dimension=x.ndim - 1)
    masked_idx = jnp.where(x == m, lane_idx, jnp.int32(c))
    first_idx = jnp.min(masked_idx, axis=-1, keepdims=True)

    y_hard = (lane_idx == first_idx).astype(x.dtype)

    # straight-through forward arithmetic, identical rounding to PyTorch
    o_ref[...] = (y_hard - x) + x
    # NOTE: rows containing NaN produce an all-zero y_hard (x == m is false
    # everywhere); torch.max would pick the NaN position. Only relevant if
    # NaNs can reach this op.


def straight_through_logits(logits, *, target_block_bytes=2 * 1024 * 1024):
    """logits: [B, S, C] -> straight-through one-hot of argmax over last axis."""
    b, s, c = logits.shape
    n_rows = b * s
    x2d = logits.reshape(n_rows, c)

    itemsize = jnp.dtype(logits.dtype).itemsize
    # sublane packing multiple: 8 for f32, 16 for bf16, 32 for int8
    sub = max(8, 32 // itemsize)

    # ~target_block_bytes per input block, rounded to the sublane multiple,
    # but never larger than the (rounded-up) number of rows we actually have.
    row_tile = max(sub, (target_block_bytes // (c * itemsize)) // sub * sub)
    rows_rounded = ((n_rows + sub - 1) // sub) * sub
    row_tile = min(row_tile, rows_rounded)

    grid = (pl.cdiv(n_rows, row_tile),)

    # VMEM budget: double-buffered input + output tiles, plus headroom.
    block_bytes = row_tile * c * itemsize
    vmem_limit = min(max(4 * block_bytes * 2, 16 << 20), 64 << 20)

    out = pl.pallas_call(
        _st_logits_kernel,
        out_shape=jax.ShapeDtypeStruct((n_rows, c), logits.dtype),
        grid_spec=pltpu.PrefetchScalarGridSpec(
            num_scalar_prefetch=0,
            grid=grid,
            in_specs=[pl.BlockSpec((row_tile, c), lambda i: (i, 0))],
            out_specs=pl.BlockSpec((row_tile, c), lambda i: (i, 0)),
        ),
        compiler_params=pltpu.CompilerParams(
            dimension_semantics=("parallel",),   # shards across v7x's 2 TCs; no-op on v5e/v6e
            vmem_limit_bytes=int(vmem_limit),
        ),
    )(x2d)

    # TODO(synk): for vocab-scale C (128k+), add a second "arbitrary" grid axis
    # over C with running max / first-index scratch instead of one full-row block.
    return out.reshape(b, s, c)


if __name__ == "__main__":
    key = jax.random.PRNGKey(0)
    B, S, C = 2, 8, 32
    logits = jax.random.normal(key, (B, S, C), dtype=jnp.float32)

    out = jax.block_until_ready(straight_through_logits(logits))

    # reference check (pure JAX)
    idx = jnp.argmax(logits, axis=-1)
    y_hard = jax.nn.one_hot(idx, C, dtype=logits.dtype)
    ref = (y_hard - logits) + logits
    assert out.shape == logits.shape and out.dtype == logits.dtype
    assert jnp.array_equal(out, ref), "mismatch vs reference"

    print("KERNEL_OK")
</pallas_src>

<mosaic_0001>
module attributes {stable_mosaic.version = 11 : i64} {
  func.func @_st_logits_kernel(%arg0: i32, %arg1: memref<16x32xf32, #tpu.memory_space<vmem>>, %arg2: memref<16x32xf32, #tpu.memory_space<vmem>>) attributes {dimension_semantics = [#tpu.dimension_semantics<parallel>], iteration_bounds = array<i64: 1>, scalar_prefetch = 0 : i64, scratch_operands = 0 : i64, tpu.core_type = #tpu.core_type<tc>, window_params = [{transform_indices = @transform_0, window_bounds = array<i64: 16, 32>}, {transform_indices = @transform_1, window_bounds = array<i64: 16, 32>}]} {
    %c0 = arith.constant 0 : index
    %c0_0 = arith.constant 0 : index
    %0 = vector.load %arg1[%c0, %c0_0] : memref<16x32xf32, #tpu.memory_space<vmem>>, vector<16x32xf32>
    %cst = arith.constant dense<0xFF800000> : vector<16xf32>
    %1 = vector.multi_reduction <maximumf>, %0, %cst [1] : vector<16x32xf32> to vector<16xf32>
    %2 = vector.shape_cast %1 : vector<16xf32> to vector<16x1xf32>
    %3 = tpu.iota {dimensions = array<i32: 1>} : vector<16x32xi32>
    %4 = vector.broadcast %2 : vector<16x1xf32> to vector<16x32xf32>
    %5 = arith.cmpf oeq, %0, %4 : vector<16x32xf32>
    %c32_i32 = arith.constant 32 : i32
    %6 = vector.broadcast %c32_i32 : i32 to vector<16x32xi32>
    %7 = arith.select %5, %3, %6 : vector<16x32xi1>, vector<16x32xi32>
    %cst_1 = arith.constant dense<2147483647> : vector<16xi32>
    %8 = vector.multi_reduction <minsi>, %7, %cst_1 [1] : vector<16x32xi32> to vector<16xi32>
    %9 = vector.shape_cast %8 : vector<16xi32> to vector<16x1xi32>
    %10 = vector.broadcast %9 : vector<16x1xi32> to vector<16x32xi32>
    %11 = arith.cmpi eq, %3, %10 : vector<16x32xi32>
    %12 = arith.extui %11 : vector<16x32xi1> to vector<16x32xi32>
    %13 = arith.sitofp %12 : vector<16x32xi32> to vector<16x32xf32>
    %14 = arith.subf %13, %0 : vector<16x32xf32>
    %15 = arith.addf %14, %0 : vector<16x32xf32>
    %c0_2 = arith.constant 0 : index
    %c0_3 = arith.constant 0 : index
    %16 = vector.load %arg2[%c0_2, %c0_3] : memref<16x32xf32, #tpu.memory_space<vmem>>, vector<16x32xf32>
    tpu.vector_store %arg2[%c0_2, %c0_3], %15 {strides = array<i32>} : memref<16x32xf32, #tpu.memory_space<vmem>>, vector<16x32xf32>,
    return
  }
  func.func @transform_0(%arg0: i32) -> (i32, i32) {
    %c0_i32 = arith.constant 0 : i32
    %c0_i32_0 = arith.constant 0 : i32
    return %arg0, %c0_i32 : i32, i32
  }
  func.func @transform_1(%arg0: i32) -> (i32, i32) {
    %c0_i32 = arith.constant 0 : i32
    %c0_i32_0 = arith.constant 0 : i32
    return %arg0, %c0_i32 : i32, i32
  }
}

</mosaic_0001>

<llo_original>
// kernel: tpu_custom_call.1
$region0: #{tpu_custom_call.1}
  #allocation0 [shape = 'u32[]', space=smem, size = 0x4, offset = 0x4, fixed_abs, tag = 'smem constant byte address 0x4 - core index']
  #allocation1 [shape = 'u32[72,128]{1,0:T(1,128)}', space=vmem, size = 0x9000, scoped, tag = 'internal scratch']
  %s0 = inlined_call_operand.hbm [shape: f32[16,32], index: 0, kind: input, shape index: {}]
  %s1 = inlined_call_operand.hbm [shape: f32[16,32], index: 1, kind: output, shape index: {}]
  %s2 = sld [smem:[#allocation0]]
  $region18: #{tpu_custom_call.1} parent=0
    _
  %s4 = ssub.s32 1, %s2
  %s5 = scalar_select 0, %s4, %s2
  $region1: #{tpu_custom_call.1} parent=0
    #allocation2 [shape = 'u8[8192]{0}', space=vmem, size = 0x2000, scoped, tag = 'input window, operand 0, single buffered']
    #allocation3 [shape = 's32[1]{0}', space=sflag, size = 0x4, scoped, tag = 'scoped memory for tpu_custom_call.1']
    #allocation4 [shape = 's32[1]{0}', space=sflag, size = 0x4, scoped, tag = 'scoped memory for tpu_custom_call.1']
    #allocation5 [shape = 'u8[8192]{0}', space=vmem, size = 0x2000, scoped, tag = 'output window, operand 0, single buffered']
    %6 = vsyncpa [#allocation3], 0
    %7 = vsyncpa [#allocation4], 0
    // Predicated region
    $region2: #{tpu_custom_call.1} parent=1 // pred_check
      _
    $region3: #{tpu_custom_call.1} parent=1 // pred_check_branch
      %9 = sbr.rel (0) target = $region5
    $region4: #{tpu_custom_call.1} parent=1 // pred_region
      %11 = vsyncadd [#allocation3], 0
      %s12 = sshll.u32 %s0, 4
      %s13 = int_to_ptr.hbm [resolvable:$true] %s12
      %s14 = sshll.u32 [#allocation2], 4
      %s15 = int_to_ptr.vmem [resolvable:$true] %s14
      %20 = dma.hbm_to_vmem [thread:$0]  %s13, 256, %s15, [#allocation3], 128, 128, 8
    $region5: #{tpu_custom_call.1} parent=1 // pred_fallthru
      _
    // Predicated region
    $region6: #{tpu_custom_call.1} parent=1 // pred_check
      _
    $region7: #{tpu_custom_call.1} parent=1 // pred_check_branch
      %22 = sbr.rel (0) target = $region9
    $region8: #{tpu_custom_call.1} parent=1 // pred_region
      %24 = dma.done [#allocation3], 256
    $region9: #{tpu_custom_call.1} parent=1 // pred_fallthru
      _
    %v25 = vld [vmem:[#allocation2] sm:$0xff]
    %v26 = vld [vmem:[#allocation2 + $0x8] sm:$0xff]
    %vm27 = vcmask 261120
    %v28 = vsel %vm27, %v25, -inf
    %29 = vmax.xlane.f32.xlu0 %v28
    %v30 = vpop.xlane.xlu0 %29
    %v31 = vsel %vm27, %v26, -inf
    %32 = vmax.xlane.f32.xlu0 %v31
    %v33 = vpop.xlane.xlu0 %32
    %v34 = vlaneseq
    %v35 = vand.u32 %v34, 127
    %vm36 = vcmp.eq.f32.partialorder %v25, %v30
    %vm37 = vcmp.eq.f32.partialorder %v26, %v33
    %v38 = vsel %vm36, %v35, 32
    %v39 = vsel %vm37, %v35, 32
    %v40 = vsel %vm27, %v38, 2147483647
    %v41 = vand.u32 %v40, 65535
    %v42 = vshra.s32 %v40, 16
    %v43 = vcvt.s32.f32 %v41
    %v44 = vcvt.s32.f32 %v42
    %45 = vmin.xlane.f32.xlu0 %v44
    %v46 = vpop.xlane.xlu0 %45
    %vm47 = vcmp.eq.f32.partialorder %v44, %v46
    %v48 = vsel %vm47, %v43, inf
    %49 = vmin.xlane.f32.xlu0 %v48
    %v50 = vpop.xlane.xlu0 %49
    %v51 = vcvt.f32.s32 %v50
    %v52 = vcvt.f32.s32 %v46
    %v53 = vshll.u32 %v52, 16
    %v54 = vadd.s32 %v53, %v51
    %v55 = vsel %vm27, %v39, 2147483647
    %v56 = vand.u32 %v55, 65535
    %v57 = vshra.s32 %v55, 16
    %v58 = vcvt.s32.f32 %v56
    %v59 = vcvt.s32.f32 %v57
    %60 = vmin.xlane.f32.xlu0 %v59
    %v61 = vpop.xlane.xlu0 %60
    %vm62 = vcmp.eq.f32.partialorder %v59, %v61
    %v63 = vsel %vm62, %v58, inf
    %64 = vmin.xlane.f32.xlu0 %v63
    %v65 = vpop.xlane.xlu0 %64
    %v66 = vcvt.f32.s32 %v65
    %v67 = vcvt.f32.s32 %v61
    %v68 = vshll.u32 %v67, 16
    %v69 = vadd.s32 %v68, %v66
    %vm70 = vcmp.eq.s32.totalorder %v35, %v54
    %vm71 = vcmp.eq.s32.totalorder %v35, %v69
    %v72 = vsel %vm70, 1, 0
    %v73 = vsel %vm71, 1, 0
    %v74 = vcvt.s32.f32 %v72
    %v75 = vcvt.s32.f32 %v73
    %v76 = vsub.f32 %v74, %v25
    %v77 = vsub.f32 %v75, %v26
    %v78 = vadd.f32 %v76, %v25
    %v79 = vadd.f32 %v77, %v26
    %80 = vst.msk [vmem:[#allocation5] sm:$0xff] %vm27, %v78
    %81 = vst.msk [vmem:[#allocation5 + $0x8] sm:$0xff] %vm27, %v79
    // Predicated region
    $region10: #{tpu_custom_call.1} parent=1 // pred_check
      _
    $region11: #{tpu_custom_call.1} parent=1 // pred_check_branch
      %83 = sbr.rel (0) target = $region13
    $region12: #{tpu_custom_call.1} parent=1 // pred_region
      %85 = vsyncadd [#allocation4], 0
      %s86 = sshll.u32 [#allocation5], 4
      %s87 = int_to_ptr.vmem [resolvable:$true] %s86
      %s88 = sshll.u32 %s1, 4
      %s89 = int_to_ptr.hbm [resolvable:$true] %s88
      %94 = dma.vmem_to_hbm [thread:$0]  %s87, 256, %s89, [#allocation4], 128, 128, 8
    $region13: #{tpu_custom_call.1} parent=1 // pred_fallthru
      _
    // Predicated region
    $region14: #{tpu_custom_call.1} parent=1 // pred_check
      _
    $region15: #{tpu_custom_call.1} parent=1 // pred_check_branch
      %96 = sbr.rel (0) target = $region17
    $region16: #{tpu_custom_call.1} parent=1 // pred_region
      %98 = dma.done [#allocation4], 256
    $region17: #{tpu_custom_call.1} parent=1 // pred_fallthru
      _
    %99 = vsyncpa [#allocation3], 1
    %100 = vsyncpa [#allocation4], 1

</llo_original>
